<compile_context>
chip_gen: v6e
topology: v6e:2x2x1
jax: 0.10.0
libtpu: 0.0.40
codegen_flags: <defaults>
</compile_context>

<pallas_src>
import jax
import jax.numpy as jnp
from jax.experimental import pallas as pl
from jax.experimental.pallas import tpu as pltpu

LANE = 128
SUBLANE = 8


def _round_up(x, m):
    return (x + m - 1) // m * m


def nsp_kernel(x_ref, w_ref, b_ref, o_ref):
    """One row-tile of y = X @ W + b; bf16 MXU operands, f32 accumulation.

    x_ref: (TM, H)   activations in their native dtype
    w_ref: (H, 128)  bfloat16 padded weight (real out-features in cols [:2])
    b_ref: (1, 128)  float32 padded bias
    o_ref: (TM, 128) bfloat16 lane-dense output tile
    """
    x = x_ref[...]
    if x.dtype != jnp.bfloat16:
        x = x.astype(jnp.bfloat16)
    acc = jnp.dot(x, w_ref[...], preferred_element_type=jnp.float32)
    o_ref[...] = (acc + b_ref[...]).astype(o_ref.dtype)


def next_sentence_pred(x, weight, bias, *, tile_rows=1024):
    """Pallas equivalent of PyTorch NextSentencePred.forward (Linear(H, 2)).

    x:      (..., H) float32 or bfloat16
    weight: (2, H)            (PyTorch nn.Linear layout: out_features x in_features)
    bias:   (2,)
    returns (..., 2) in x's dtype
    """
    orig_shape = x.shape
    H = orig_shape[-1]
    n_out = weight.shape[0]

    x2d = x.reshape(-1, H)          # keep native dtype; no forced f32 pass
    N = x2d.shape[0]
    x_bytes = x2d.dtype.itemsize

    # Pad out-features 2 -> 128: output tile is lane-dense (unmasked vst).
    out_pad = _round_up(max(n_out, 1), LANE)
    w_pad = jnp.zeros((H, out_pad), jnp.bfloat16).at[:, :n_out].set(
        weight.T.astype(jnp.bfloat16))
    b_pad = jnp.zeros((1, out_pad), jnp.float32).at[0, :n_out].set(
        bias.astype(jnp.float32))

    # Row tile: multiple of 8 (or == N for tiny inputs), >=2 grid steps when
    # possible (v7x megacore), clamped to a ~24 MiB double-buffered VMEM budget.
    if N <= SUBLANE:
        tm = N
    else:
        tm = min(tile_rows, _round_up(pl.cdiv(N, 2), SUBLANE))
        per_row = 2 * (H * x_bytes + out_pad * 2)          # dbl-buffered in + out
        budget = 24 * 1024 * 1024 - 2 * (H * out_pad * 2)  # minus weight buffers
        tm_cap = max(SUBLANE, (budget // per_row) // SUBLANE * SUBLANE)
        tm = max(SUBLANE, min(tm, tm_cap))

    grid = (pl.cdiv(N, tm),)        # ragged last block: no zero-pad copy of X

    cost = pl.CostEstimate(
        flops=2 * N * H * n_out,
        transcendentals=0,
        bytes_accessed=N * H * x_bytes + N * out_pad * 2 + H * out_pad * 2
        + out_pad * 4)

    out = pl.pallas_call(
        nsp_kernel,
        out_shape=jax.ShapeDtypeStruct((N, out_pad), jnp.bfloat16),
        grid=grid,
        in_specs=[
            pl.BlockSpec((tm, H), lambda i: (i, 0)),        # activation row tile
            pl.BlockSpec((H, out_pad), lambda i: (0, 0)),   # whole (small) weight
            pl.BlockSpec((1, out_pad), lambda i: (0, 0)),   # bias
        ],
        out_specs=pl.BlockSpec((tm, out_pad), lambda i: (i, 0)),
        compiler_params=pltpu.CompilerParams(
            dimension_semantics=("parallel",)),             # megacore-shard rows
        cost_estimate=cost,
    )(x2d, w_pad, b_pad)

    # Slice the 2 real logits back out (free XLA slice) and match X's dtype.
    return out[:, :n_out].astype(x.dtype).reshape(*orig_shape[:-1], n_out)


if __name__ == "__main__":
    # Small shapes consistent with the module: batch=2, num_inputs(hidden)=32.
    B, H = 2, 32
    key = jax.random.PRNGKey(0)
    kx, kw, kb, kx2 = jax.random.split(key, 4)

    x = jax.random.normal(kx, (B, H), jnp.float32)
    weight = jax.random.normal(kw, (2, H), jnp.float32) * 0.02  # nn.Linear weight (2, H)
    bias = jax.random.normal(kb, (2,), jnp.float32) * 0.02      # nn.Linear bias (2,)

    ref = x @ weight.T + bias

    # f32 activations (single ragged block, grid of 1).
    y = next_sentence_pred(x, weight, bias)
    jax.block_until_ready(y)
    assert y.shape == (B, 2) and y.dtype == jnp.float32
    assert jnp.allclose(y, ref, rtol=5e-2, atol=5e-3), "mismatch vs f32 reference"

    # bf16 activations (native-dtype path, no wrapper cast / extra HBM pass).
    y_bf = next_sentence_pred(x.astype(jnp.bfloat16), weight, bias)
    jax.block_until_ready(y_bf)
    assert y_bf.shape == (B, 2) and y_bf.dtype == jnp.bfloat16
    assert jnp.allclose(y_bf.astype(jnp.float32), ref, rtol=8e-2, atol=8e-3)

    # Multi-tile ragged-grid path (flattened leading dims, >=2 grid steps).
    x_big = jax.random.normal(kx2, (2, 300, H), jnp.float32)
    y_big = next_sentence_pred(x_big, weight, bias)
    jax.block_until_ready(y_big)
    ref_big = x_big @ weight.T + bias
    assert y_big.shape == (2, 300, 2)
    assert jnp.allclose(y_big, ref_big, rtol=5e-2, atol=5e-3)

    print("KERNEL_OK")
</pallas_src>

<mosaic_0001>
module attributes {stable_mosaic.version = 11 : i64} {
  func.func @nsp_kernel(%arg0: i32, %arg1: memref<2x32xf32, #tpu.memory_space<vmem>>, %arg2: memref<32x128xbf16, #tpu.memory_space<vmem>>, %arg3: memref<1x128xf32, #tpu.memory_space<vmem>>, %arg4: memref<2x128xbf16, #tpu.memory_space<vmem>>) attributes {dimension_semantics = [#tpu.dimension_semantics<parallel>], iteration_bounds = array<i64: 1>, scalar_prefetch = 0 : i64, scratch_operands = 0 : i64, tpu.core_type = #tpu.core_type<tc>, window_params = [{transform_indices = @transform_0, window_bounds = array<i64: 2, 32>}, {pipeline_mode = #tpu.pipeline_mode<synchronous>, transform_indices = @transform_1, window_bounds = array<i64: 32, 128>}, {pipeline_mode = #tpu.pipeline_mode<synchronous>, transform_indices = @transform_2, window_bounds = array<i64: 1, 128>}, {transform_indices = @transform_3, window_bounds = array<i64: 2, 128>}]} {
    %c0 = arith.constant 0 : index
    %c0_0 = arith.constant 0 : index
    %0 = vector.load %arg1[%c0, %c0_0] : memref<2x32xf32, #tpu.memory_space<vmem>>, vector<2x32xf32>
    %1 = arith.truncf %0 : vector<2x32xf32> to vector<2x32xbf16>
    %c0_1 = arith.constant 0 : index
    %c0_2 = arith.constant 0 : index
    %2 = vector.load %arg2[%c0_1, %c0_2] : memref<32x128xbf16, #tpu.memory_space<vmem>>, vector<32x128xbf16>
    %cst = arith.constant dense<0.000000e+00> : vector<2x128xf32>
    %3 = tpu.matmul %1, %2, %cst {dimension_numbers = #tpu.dot_dimension_numbers<[1], [0], [0], [1], [0, 0, 1, 1], [], []>} : vector<2x32xbf16>, vector<32x128xbf16>, vector<2x128xf32> -> vector<2x128xf32>
    %c0_3 = arith.constant 0 : index
    %c0_4 = arith.constant 0 : index
    %4 = vector.load %arg3[%c0_3, %c0_4] : memref<1x128xf32, #tpu.memory_space<vmem>>, vector<1x128xf32>
    %5 = vector.broadcast %4 : vector<1x128xf32> to vector<2x128xf32>
    %6 = arith.addf %3, %5 : vector<2x128xf32>
    %7 = arith.truncf %6 : vector<2x128xf32> to vector<2x128xbf16>
    %c0_5 = arith.constant 0 : index
    %c0_6 = arith.constant 0 : index
    %8 = vector.load %arg4[%c0_5, %c0_6] : memref<2x128xbf16, #tpu.memory_space<vmem>>, vector<2x128xbf16>
    tpu.vector_store %arg4[%c0_5, %c0_6], %7 {strides = array<i32>} : memref<2x128xbf16, #tpu.memory_space<vmem>>, vector<2x128xbf16>,
    return
  }
  func.func @transform_0(%arg0: i32) -> (i32, i32) {
    %c0_i32 = arith.constant 0 : i32
    %c0_i32_0 = arith.constant 0 : i32
    return %arg0, %c0_i32 : i32, i32
  }
  func.func @transform_1(%arg0: i32) -> (i32, i32) {
    %c0_i32 = arith.constant 0 : i32
    %c0_i32_0 = arith.constant 0 : i32
    %c0_i32_1 = arith.constant 0 : i32
    return %c0_i32, %c0_i32_0 : i32, i32
  }
  func.func @transform_2(%arg0: i32) -> (i32, i32) {
    %c0_i32 = arith.constant 0 : i32
    %c0_i32_0 = arith.constant 0 : i32
    %c0_i32_1 = arith.constant 0 : i32
    return %c0_i32, %c0_i32_0 : i32, i32
  }
  func.func @transform_3(%arg0: i32) -> (i32, i32) {
    %c0_i32 = arith.constant 0 : i32
    %c0_i32_0 = arith.constant 0 : i32
    return %arg0, %c0_i32 : i32, i32
  }
}

</mosaic_0001>

<llo_original>
// kernel: tpu_custom_call.1
$region0: #{tpu_custom_call.1}
  #allocation0 [shape = 'u32[]', space=smem, size = 0x4, offset = 0x4, fixed_abs, tag = 'smem constant byte address 0x4 - core index']
  #allocation1 [shape = 'u32[144,128]{1,0:T(1,128)}', space=vmem, size = 0x12000, scoped, tag = 'internal scratch']
  %s0 = inlined_call_operand.hbm [shape: f32[2,32], index: 0, kind: input, shape index: {}]
  %s1 = inlined_call_operand.hbm [shape: bf16[32,128], index: 1, kind: input, shape index: {}]
  %s2 = inlined_call_operand.vmem [shape: f32[1,128], index: 2, kind: input, shape index: {}]
  %s3 = inlined_call_operand.hbm [shape: bf16[2,128], index: 3, kind: output, shape index: {}]
  %s4 = sld [smem:[#allocation0]]
  $region30: #{tpu_custom_call.1} parent=0
    _
  %s6 = ssub.s32 1, %s4
  %s7 = scalar_select 0, %s6, %s4
  $region1: #{tpu_custom_call.1} parent=0
    #allocation2 [shape = 'u8[1024]{0}', space=vmem, size = 0x400, scoped, tag = 'input window, operand 0, single buffered']
    #allocation3 [shape = 's32[1]{0}', space=sflag, size = 0x4, scoped, tag = 'scoped memory for tpu_custom_call.1']
    #allocation4 [shape = 's32[1]{0}', space=sflag, size = 0x4, scoped, tag = 'scoped memory for tpu_custom_call.1']
    #allocation5 [shape = 'u8[8192]{0}', space=vmem, size = 0x2000, scoped, tag = 'input window, operand 1, single buffered']
    #allocation6 [shape = 's32[1]{0}', space=sflag, size = 0x4, scoped, tag = 'scoped memory for tpu_custom_call.1']
    #allocation7 [shape = 'u8[512]{0}', space=vmem, size = 0x400, scoped, tag = 'output window, operand 0, single buffered']
    %8 = vsyncpa [#allocation3], 0
    %9 = vsyncpa [#allocation6], 0
    %10 = vsyncpa [#allocation4], 0
    // Predicated region
    $region2: #{tpu_custom_call.1} parent=1 // pred_check
      _
    $region3: #{tpu_custom_call.1} parent=1 // pred_check_branch
      %12 = sbr.rel (0) target = $region5
    $region4: #{tpu_custom_call.1} parent=1 // pred_region
      %s14 = ssub.s32 32, 32
      %15 = vsyncadd [#allocation3], %s14
      %s17 = sshll.u32 [#allocation2], 4
      %s18 = int_to_ptr.vmem [resolvable:$true] %s17
      %20 = dma.hbm_to_vmem [thread:$0]  %s0, 32, %s18, [#allocation3]
    $region5: #{tpu_custom_call.1} parent=1 // pred_fallthru
      _
    // Predicated region
    $region6: #{tpu_custom_call.1} parent=1 // pred_check
      _
    $region7: #{tpu_custom_call.1} parent=1 // pred_check_branch
      %22 = sbr.rel (0) target = $region9
    $region8: #{tpu_custom_call.1} parent=1 // pred_region
      %s24 = ssub.s32 256, 256
      %25 = vsyncadd [#allocation6], %s24
      %s26 = sshll.u32 [#allocation5], 4
      %s27 = int_to_ptr.vmem [resolvable:$true] %s26
      %32 = dma.hbm_to_vmem [thread:$0]  %s1, 256, %s27, [#allocation6], 64, 64, 4
    $region9: #{tpu_custom_call.1} parent=1 // pred_fallthru
      _
    // Predicated region
    $region10: #{tpu_custom_call.1} parent=1 // pred_check
      _
    $region11: #{tpu_custom_call.1} parent=1 // pred_check_branch
      %34 = sbr.rel (0) target = $region13
    $region12: #{tpu_custom_call.1} parent=1 // pred_region
      _
    $region13: #{tpu_custom_call.1} parent=1 // pred_fallthru
      _
    // Predicated region
    $region14: #{tpu_custom_call.1} parent=1 // pred_check
      _
    $region15: #{tpu_custom_call.1} parent=1 // pred_check_branch
      %36 = sbr.rel (0) target = $region17
    $region16: #{tpu_custom_call.1} parent=1 // pred_region
      %37 = dma.done [#allocation3], 32
    $region17: #{tpu_custom_call.1} parent=1 // pred_fallthru
      _
    // Predicated region
    $region18: #{tpu_custom_call.1} parent=1 // pred_check
      _
    $region19: #{tpu_custom_call.1} parent=1 // pred_check_branch
      %39 = sbr.rel (0) target = $region21
    $region20: #{tpu_custom_call.1} parent=1 // pred_region
      %40 = dma.done [#allocation6], 256
    $region21: #{tpu_custom_call.1} parent=1 // pred_fallthru
      _
    %v42 = vld [vmem:[#allocation2] sm:$0x3]
    %v43 = vpack.c.bf16 %v42, %v42
    %v44 = vld [vmem:[#allocation5] sm:$0xf]
    %v45 = vld [vmem:[#allocation5 + $0x4] sm:$0xf]
    %v46 = vld [vmem:[#allocation5 + $0x8] sm:$0xf]
    %v47 = vld [vmem:[#allocation5 + $0xc] sm:$0xf]
    %v48 = vld [vmem:[%s2] sm:$0x1]
    %v50 = vlaneseq
    %v51 = vshrl.u32 %v50, 7
    %v52 = vsub.s32 0, %v51
    %v53 = vrot.slane %v48, %v52
    %v59 = vunpack.c.l.b16 %v44
    %v60 = vunpack.c.l.b16 %v45
    %v61 = vunpack.c.l.b16 %v46
    %v62 = vunpack.c.l.b16 %v47
    %v63 = vpack.c.b16 %v60, %v59
    %v64 = vpack.c.b16 %v62, %v61
    %vm67 = vcmask 261120
    %v69 = vsel %vm67, %v43, 0
    %71 = vmatprep.subr.bf16.mxu0 0
    %72 = vmatpush1.bf16.msra.mxu0 0
    %73 = vmatprep.subr.bf16.mxu0 0
    %74 = vmatpush1.bf16.msra.mxu0 0
    %75 = vmatprep.subr.bf16.mxu0 0
    %76 = vmatpush1.bf16.msra.mxu0 0
    %77 = vmatprep.subr.bf16.mxu0 0
    %78 = vmatpush1.bf16.msra.mxu0 0
    %79 = vmatprep.subr.bf16.mxu0 0
    %80 = vmatpush1.bf16.msra.mxu0 0
    %81 = vmatprep.subr.bf16.mxu0 0
    %82 = vmatpush1.bf16.msra.mxu0 0
    %83 = vmatprep.subr.bf16.mxu0 0
    %84 = vmatpush1.bf16.msra.mxu0 %v64
    %85 = vmatprep.subr.bf16.mxu0 0
    %86 = vmatpush1.bf16.msra.mxu0 %v63
    %87 = vmatprep.subr.bf16.mxu0 0
    %88 = vmatpush2.bf16.msra.mxu0 0
    %89 = vmatprep.subr.bf16.mxu0 0
    %90 = vmatpush2.bf16.msra.mxu0 0
    %91 = vmatprep.subr.bf16.mxu0 0
    %92 = vmatpush2.bf16.msra.mxu0 0
    %93 = vmatprep.subr.bf16.mxu0 0
    %94 = vmatpush2.bf16.msra.mxu0 0
    %95 = vmatprep.subr.bf16.mxu0 0
    %96 = vmatpush2.bf16.msra.mxu0 0
    %97 = vmatprep.subr.bf16.mxu0 0
    %98 = vmatpush2.bf16.msra.mxu0 0
    %99 = vmatprep.subr.bf16.mxu0 0
    %100 = vmatpush2.bf16.msra.mxu0 0
    %101 = vmatprep.subr.bf16.mxu0 0
    %102 = vmatpush2.bf16.msra.mxu0 0
    %103 = vmatprep.mubr.bf16.mxu0 0
    %104 = vmatmul.mubr.bf16.gmra.mxu0 %v69
    %v105 = vpop.f32.mrf.mxu0
    %v106 = vadd.f32 %v53, %v105
    %v107 = vpop.f32.mrf.mxu0
    %v108 = vpop.f32.mrf.mxu0
    %v109 = vpop.f32.mrf.mxu0
    %110 = vdwg.mxu0
    %v111 = vpack.c.bf16 %v106, %v106
    %112 = vst [vmem:[#allocation7] sm:$0x1] %v111
    // Predicated region
    $region22: #{tpu_custom_call.1} parent=1 // pred_check
      _
    $region23: #{tpu_custom_call.1} parent=1 // pred_check_branch
      %114 = sbr.rel (0) target = $region25
    $region24: #{tpu_custom_call.1} parent=1 // pred_region
      %s116 = ssub.s32 16, 16
      %117 = vsyncadd [#allocation4], %s116
      %s119 = sshll.u32 [#allocation7], 4
      %s120 = int_to_ptr.vmem [resolvable:$true] %s119
      %122 = dma.vmem_to_hbm [thread:$0]  %s120, 16, %s3, [#allocation4]
    $region25: #{tpu_custom_call.1} parent=1 // pred_fallthru
      _
    // Predicated region
    $region26: #{tpu_custom_call.1} parent=1 // pred_check
      _
    $region27: #{tpu_custom_call.1} parent=1 // pred_check_branch
      %124 = sbr.rel (0) target = $region29
    $region28: #{tpu_custom_call.1} parent=1 // pred_region
      %125 = dma.done [#allocation4], 16
    $region29: #{tpu_custom_call.1} parent=1 // pred_fallthru
      _
    %126 = vsyncpa [#allocation3], 1
    %127 = vsyncpa [#allocation6], 1
    %128 = vsyncpa [#allocation4], 1

</llo_original>
